<compile_context>
chip_gen: v7x
topology: tpu7x:2x2x1
jax: 0.10.0
libtpu: 0.0.40
codegen_flags: <defaults>
</compile_context>

<pallas_src>
import jax
import jax.numpy as jnp
from jax.experimental import pallas as pl
from jax.experimental.pallas import tpu as pltpu


def lnn_kernel(x_ref, w_in_ref, b_in_ref, inv_tau_ref, one_minus_ref,
               w_out_ref, b_out_ref, o_ref):
    B, T, _ = x_ref.shape
    H = w_in_ref.shape[1]

    # Hoist loop-invariant loads and broadcasts out of the time loop.
    w_in = w_in_ref[...]                                      # (I, H)
    b_in = jnp.broadcast_to(b_in_ref[...], (B, H))            # (B, H)
    inv_tau = jnp.broadcast_to(inv_tau_ref[...], (B, H))      # (B, H)
    one_minus = jnp.broadcast_to(one_minus_ref[...], (B, H))  # (B, H)

    h = jnp.zeros((B, H), jnp.float32)
    # T is a compile-time constant; a static Python loop fully unrolls the
    # recurrence (equivalent of lax.fori_loop(..., unroll=True)).
    # TODO(synk): for very long sequences, chunk T via an "arbitrary" grid
    # axis with the hidden state carried in a VMEM scratch instead of fully
    # unrolling / keeping the whole sequence resident.
    for t in range(T):
        x_t = x_ref[:, t, :]                                  # (B, I) static slice
        ic = jnp.dot(x_t, w_in, preferred_element_type=jnp.float32) + b_in
        h = h * one_minus + jnp.tanh(ic) * inv_tau

    # Fused output projection: h @ W_out + b_out (dropout == identity, eval).
    o_ref[...] = (jnp.dot(h, w_out_ref[...], preferred_element_type=jnp.float32)
                  + b_out_ref[...])


def _round_up(n, m):
    return ((n + m - 1) // m) * m


def liquid_network_forward(x_seq, w_in, b_in, tau, w_out, b_out):
    """x_seq: [B, T, I] (PyTorch convention). Returns [B, O]."""
    B, T, I = x_seq.shape
    H = w_in.shape[1]
    O = w_out.shape[1]

    # Pad to vreg/MXU-aligned sizes: sublane multiple for B, lane multiples
    # for I / H / O (unmasked vector ops, lane-dense output store).
    Bp = _round_up(B, 8)
    Ip = _round_up(I, 128)
    Hp = _round_up(H, 128)
    Op = _round_up(O, 128)

    f32 = jnp.float32
    x_p = jnp.zeros((Bp, T, Ip), f32).at[:B, :, :I].set(x_seq.astype(f32))
    w_in_p = jnp.zeros((Ip, Hp), f32).at[:I, :H].set(w_in.astype(f32))
    b_in_p = jnp.zeros((1, Hp), f32).at[0, :H].set(b_in.astype(f32))
    # Pad tau with ones so 1/tau stays finite in padded lanes; padded hidden
    # lanes see zero weights/bias so they remain exactly zero through the
    # recurrence and contribute nothing to the output projection.
    tau_p = jnp.ones((Hp,), f32).at[:H].set(tau.astype(f32))
    inv_tau_p = (1.0 / tau_p).reshape(1, Hp)
    one_minus_p = 1.0 - inv_tau_p
    w_out_p = jnp.zeros((Hp, Op), f32).at[:H, :O].set(w_out.astype(f32))
    b_out_p = jnp.zeros((1, Op), f32).at[0, :O].set(b_out.astype(f32))

    in_specs = [pl.BlockSpec(memory_space=pltpu.MemorySpace.VMEM)
                for _ in range(7)]
    out_p = pl.pallas_call(
        lnn_kernel,
        out_shape=jax.ShapeDtypeStruct((Bp, Op), f32),
        in_specs=in_specs,
        out_specs=pl.BlockSpec(memory_space=pltpu.MemorySpace.VMEM),
    )(x_p, w_in_p, b_in_p, inv_tau_p, one_minus_p, w_out_p, b_out_p)
    return out_p[:B, :O]


def liquid_network_reference(x_seq, w_in, b_in, tau, w_out, b_out):
    """Pure-JAX reference matching the PyTorch forward (eval mode)."""
    B, T, I = x_seq.shape
    H = w_in.shape[1]
    h = jnp.zeros((B, H), jnp.float32)
    for t in range(T):
        x_t = x_seq[:, t, :]
        ic = x_t @ w_in + b_in
        dh = (-h + jnp.tanh(ic)) / tau
        h = h + dh
    return h @ w_out + b_out


if __name__ == "__main__":
    # Module config (small, consistent with forward semantics).
    batch, seq_len = 2, 8
    input_size, hidden_size, output_size = 16, 32, 4

    key = jax.random.PRNGKey(0)
    k_x, k_w, k_out = jax.random.split(key, 3)

    # Deterministic parameter init mirroring the module's __init__:
    #   input_weights ~ randn * 0.01, input_bias = 0, tau = 0.6,
    #   output Linear: xavier_uniform weight, zero bias.
    w_in = 0.01 * jax.random.normal(k_w, (input_size, hidden_size), jnp.float32)
    b_in = jnp.zeros((hidden_size,), jnp.float32)
    tau = jnp.full((hidden_size,), 0.6, jnp.float32)
    bound = (6.0 / (hidden_size + output_size)) ** 0.5
    # stored already transposed relative to torch's [O, H] -> [H, O]
    w_out = jax.random.uniform(k_out, (hidden_size, output_size), jnp.float32,
                               minval=-bound, maxval=bound)
    b_out = jnp.zeros((output_size,), jnp.float32)

    x_seq = jax.random.normal(k_x, (batch, seq_len, input_size), jnp.float32)

    out = liquid_network_forward(x_seq, w_in, b_in, tau, w_out, b_out)
    out = jax.block_until_ready(out)

    ref = liquid_network_reference(x_seq, w_in, b_in, tau, w_out, b_out)
    assert out.shape == (batch, output_size)
    assert jnp.allclose(out, ref, atol=1e-5, rtol=1e-5)

    print("KERNEL_OK")
</pallas_src>

<mosaic_0001>
module attributes {stable_mosaic.version = 11 : i64} {
  func.func @lnn_kernel(%arg0: memref<8x8x128xf32, #tpu.memory_space<vmem>>, %arg1: memref<128x128xf32, #tpu.memory_space<vmem>>, %arg2: memref<1x128xf32, #tpu.memory_space<vmem>>, %arg3: memref<1x128xf32, #tpu.memory_space<vmem>>, %arg4: memref<1x128xf32, #tpu.memory_space<vmem>>, %arg5: memref<128x128xf32, #tpu.memory_space<vmem>>, %arg6: memref<1x128xf32, #tpu.memory_space<vmem>>, %arg7: memref<8x128xf32, #tpu.memory_space<vmem>>) attributes {dimension_semantics = [], scalar_prefetch = 0 : i64, scratch_operands = 0 : i64, tpu.core_type = #tpu.core_type<tc>} {
    %c0 = arith.constant 0 : index
    %c0_0 = arith.constant 0 : index
    %0 = vector.load %arg1[%c0, %c0_0] : memref<128x128xf32, #tpu.memory_space<vmem>>, vector<128x128xf32>
    %c0_1 = arith.constant 0 : index
    %c0_2 = arith.constant 0 : index
    %1 = vector.load %arg2[%c0_1, %c0_2] : memref<1x128xf32, #tpu.memory_space<vmem>>, vector<1x128xf32>
    %2 = vector.shape_cast %1 : vector<1x128xf32> to vector<1x128xf32>
    %3 = vector.broadcast %2 : vector<1x128xf32> to vector<8x128xf32>
    %c0_3 = arith.constant 0 : index
    %c0_4 = arith.constant 0 : index
    %4 = vector.load %arg3[%c0_3, %c0_4] : memref<1x128xf32, #tpu.memory_space<vmem>>, vector<1x128xf32>
    %5 = vector.shape_cast %4 : vector<1x128xf32> to vector<1x128xf32>
    %6 = vector.broadcast %5 : vector<1x128xf32> to vector<8x128xf32>
    %c0_5 = arith.constant 0 : index
    %c0_6 = arith.constant 0 : index
    %7 = vector.load %arg4[%c0_5, %c0_6] : memref<1x128xf32, #tpu.memory_space<vmem>>, vector<1x128xf32>
    %8 = vector.shape_cast %7 : vector<1x128xf32> to vector<1x128xf32>
    %9 = vector.broadcast %8 : vector<1x128xf32> to vector<8x128xf32>
    %cst = arith.constant 0.000000e+00 : f32
    %10 = vector.broadcast %cst : f32 to vector<8x128xf32>
    %c0_7 = arith.constant 0 : index
    %c0_8 = arith.constant 0 : index
    %c0_9 = arith.constant 0 : index
    %11 = vector.load %arg0[%c0_7, %c0_8, %c0_9] : memref<8x8x128xf32, #tpu.memory_space<vmem>>, vector<8x1x128xf32>
    %12 = vector.shape_cast %11 : vector<8x1x128xf32> to vector<8x128xf32>
    %cst_10 = arith.constant dense<0.000000e+00> : vector<8x128xf32>
    %13 = tpu.matmul %12, %0, %cst_10 {dimension_numbers = #tpu.dot_dimension_numbers<[1], [0], [0], [1], [0, 0, 1, 1], [], []>} : vector<8x128xf32>, vector<128x128xf32>, vector<8x128xf32> -> vector<8x128xf32>
    %14 = arith.addf %13, %3 : vector<8x128xf32>
    %15 = arith.mulf %10, %9 : vector<8x128xf32>
    %16 = math.tanh %14 : vector<8x128xf32>
    %17 = arith.mulf %16, %6 : vector<8x128xf32>
    %18 = arith.addf %15, %17 : vector<8x128xf32>
    %c0_11 = arith.constant 0 : index
    %c1 = arith.constant 1 : index
    %c0_12 = arith.constant 0 : index
    %19 = vector.load %arg0[%c0_11, %c1, %c0_12] : memref<8x8x128xf32, #tpu.memory_space<vmem>>, vector<8x1x128xf32>
    %20 = vector.shape_cast %19 : vector<8x1x128xf32> to vector<8x128xf32>
    %cst_13 = arith.constant dense<0.000000e+00> : vector<8x128xf32>
    %21 = tpu.matmul %20, %0, %cst_13 {dimension_numbers = #tpu.dot_dimension_numbers<[1], [0], [0], [1], [0, 0, 1, 1], [], []>} : vector<8x128xf32>, vector<128x128xf32>, vector<8x128xf32> -> vector<8x128xf32>
    %22 = arith.addf %21, %3 : vector<8x128xf32>
    %23 = arith.mulf %18, %9 : vector<8x128xf32>
    %24 = math.tanh %22 : vector<8x128xf32>
    %25 = arith.mulf %24, %6 : vector<8x128xf32>
    %26 = arith.addf %23, %25 : vector<8x128xf32>
    %c0_14 = arith.constant 0 : index
    %c2 = arith.constant 2 : index
    %c0_15 = arith.constant 0 : index
    %27 = vector.load %arg0[%c0_14, %c2, %c0_15] : memref<8x8x128xf32, #tpu.memory_space<vmem>>, vector<8x1x128xf32>
    %28 = vector.shape_cast %27 : vector<8x1x128xf32> to vector<8x128xf32>
    %cst_16 = arith.constant dense<0.000000e+00> : vector<8x128xf32>
    %29 = tpu.matmul %28, %0, %cst_16 {dimension_numbers = #tpu.dot_dimension_numbers<[1], [0], [0], [1], [0, 0, 1, 1], [], []>} : vector<8x128xf32>, vector<128x128xf32>, vector<8x128xf32> -> vector<8x128xf32>
    %30 = arith.addf %29, %3 : vector<8x128xf32>
    %31 = arith.mulf %26, %9 : vector<8x128xf32>
    %32 = math.tanh %30 : vector<8x128xf32>
    %33 = arith.mulf %32, %6 : vector<8x128xf32>
    %34 = arith.addf %31, %33 : vector<8x128xf32>
    %c0_17 = arith.constant 0 : index
    %c3 = arith.constant 3 : index
    %c0_18 = arith.constant 0 : index
    %35 = vector.load %arg0[%c0_17, %c3, %c0_18] : memref<8x8x128xf32, #tpu.memory_space<vmem>>, vector<8x1x128xf32>
    %36 = vector.shape_cast %35 : vector<8x1x128xf32> to vector<8x128xf32>
    %cst_19 = arith.constant dense<0.000000e+00> : vector<8x128xf32>
    %37 = tpu.matmul %36, %0, %cst_19 {dimension_numbers = #tpu.dot_dimension_numbers<[1], [0], [0], [1], [0, 0, 1, 1], [], []>} : vector<8x128xf32>, vector<128x128xf32>, vector<8x128xf32> -> vector<8x128xf32>
    %38 = arith.addf %37, %3 : vector<8x128xf32>
    %39 = arith.mulf %34, %9 : vector<8x128xf32>
    %40 = math.tanh %38 : vector<8x128xf32>
    %41 = arith.mulf %40, %6 : vector<8x128xf32>
    %42 = arith.addf %39, %41 : vector<8x128xf32>
    %c0_20 = arith.constant 0 : index
    %c4 = arith.constant 4 : index
    %c0_21 = arith.constant 0 : index
    %43 = vector.load %arg0[%c0_20, %c4, %c0_21] : memref<8x8x128xf32, #tpu.memory_space<vmem>>, vector<8x1x128xf32>
    %44 = vector.shape_cast %43 : vector<8x1x128xf32> to vector<8x128xf32>
    %cst_22 = arith.constant dense<0.000000e+00> : vector<8x128xf32>
    %45 = tpu.matmul %44, %0, %cst_22 {dimension_numbers = #tpu.dot_dimension_numbers<[1], [0], [0], [1], [0, 0, 1, 1], [], []>} : vector<8x128xf32>, vector<128x128xf32>, vector<8x128xf32> -> vector<8x128xf32>
    %46 = arith.addf %45, %3 : vector<8x128xf32>
    %47 = arith.mulf %42, %9 : vector<8x128xf32>
    %48 = math.tanh %46 : vector<8x128xf32>
    %49 = arith.mulf %48, %6 : vector<8x128xf32>
    %50 = arith.addf %47, %49 : vector<8x128xf32>
    %c0_23 = arith.constant 0 : index
    %c5 = arith.constant 5 : index
    %c0_24 = arith.constant 0 : index
    %51 = vector.load %arg0[%c0_23, %c5, %c0_24] : memref<8x8x128xf32, #tpu.memory_space<vmem>>, vector<8x1x128xf32>
    %52 = vector.shape_cast %51 : vector<8x1x128xf32> to vector<8x128xf32>
    %cst_25 = arith.constant dense<0.000000e+00> : vector<8x128xf32>
    %53 = tpu.matmul %52, %0, %cst_25 {dimension_numbers = #tpu.dot_dimension_numbers<[1], [0], [0], [1], [0, 0, 1, 1], [], []>} : vector<8x128xf32>, vector<128x128xf32>, vector<8x128xf32> -> vector<8x128xf32>
    %54 = arith.addf %53, %3 : vector<8x128xf32>
    %55 = arith.mulf %50, %9 : vector<8x128xf32>
    %56 = math.tanh %54 : vector<8x128xf32>
    %57 = arith.mulf %56, %6 : vector<8x128xf32>
    %58 = arith.addf %55, %57 : vector<8x128xf32>
    %c0_26 = arith.constant 0 : index
    %c6 = arith.constant 6 : index
    %c0_27 = arith.constant 0 : index
    %59 = vector.load %arg0[%c0_26, %c6, %c0_27] : memref<8x8x128xf32, #tpu.memory_space<vmem>>, vector<8x1x128xf32>
    %60 = vector.shape_cast %59 : vector<8x1x128xf32> to vector<8x128xf32>
    %cst_28 = arith.constant dense<0.000000e+00> : vector<8x128xf32>
    %61 = tpu.matmul %60, %0, %cst_28 {dimension_numbers = #tpu.dot_dimension_numbers<[1], [0], [0], [1], [0, 0, 1, 1], [], []>} : vector<8x128xf32>, vector<128x128xf32>, vector<8x128xf32> -> vector<8x128xf32>
    %62 = arith.addf %61, %3 : vector<8x128xf32>
    %63 = arith.mulf %58, %9 : vector<8x128xf32>
    %64 = math.tanh %62 : vector<8x128xf32>
    %65 = arith.mulf %64, %6 : vector<8x128xf32>
    %66 = arith.addf %63, %65 : vector<8x128xf32>
    %c0_29 = arith.constant 0 : index
    %c7 = arith.constant 7 : index
    %c0_30 = arith.constant 0 : index
    %67 = vector.load %arg0[%c0_29, %c7, %c0_30] : memref<8x8x128xf32, #tpu.memory_space<vmem>>, vector<8x1x128xf32>
    %68 = vector.shape_cast %67 : vector<8x1x128xf32> to vector<8x128xf32>
    %cst_31 = arith.constant dense<0.000000e+00> : vector<8x128xf32>
    %69 = tpu.matmul %68, %0, %cst_31 {dimension_numbers = #tpu.dot_dimension_numbers<[1], [0], [0], [1], [0, 0, 1, 1], [], []>} : vector<8x128xf32>, vector<128x128xf32>, vector<8x128xf32> -> vector<8x128xf32>
    %70 = arith.addf %69, %3 : vector<8x128xf32>
    %71 = arith.mulf %66, %9 : vector<8x128xf32>
    %72 = math.tanh %70 : vector<8x128xf32>
    %73 = arith.mulf %72, %6 : vector<8x128xf32>
    %74 = arith.addf %71, %73 : vector<8x128xf32>
    %c0_32 = arith.constant 0 : index
    %c0_33 = arith.constant 0 : index
    %75 = vector.load %arg5[%c0_32, %c0_33] : memref<128x128xf32, #tpu.memory_space<vmem>>, vector<128x128xf32>
    %cst_34 = arith.constant dense<0.000000e+00> : vector<8x128xf32>
    %76 = tpu.matmul %74, %75, %cst_34 {dimension_numbers = #tpu.dot_dimension_numbers<[1], [0], [0], [1], [0, 0, 1, 1], [], []>} : vector<8x128xf32>, vector<128x128xf32>, vector<8x128xf32> -> vector<8x128xf32>
    %c0_35 = arith.constant 0 : index
    %c0_36 = arith.constant 0 : index
    %77 = vector.load %arg6[%c0_35, %c0_36] : memref<1x128xf32, #tpu.memory_space<vmem>>, vector<1x128xf32>
    %78 = vector.broadcast %77 : vector<1x128xf32> to vector<8x128xf32>
    %79 = arith.addf %76, %78 : vector<8x128xf32>
    %c0_37 = arith.constant 0 : index
    %c0_38 = arith.constant 0 : index
    %80 = vector.load %arg7[%c0_37, %c0_38] : memref<8x128xf32, #tpu.memory_space<vmem>>, vector<8x128xf32>
    tpu.vector_store %arg7[%c0_37, %c0_38], %79 {strides = array<i32>} : memref<8x128xf32, #tpu.memory_space<vmem>>, vector<8x128xf32>,
    return
  }
}

</mosaic_0001>

<llo_original>
// kernel: tpu_custom_call.1
$region0: #{tpu_custom_call.1}
  #allocation0 [shape = 'u32[]', space=smem, size = 0x4, offset = 0x4, fixed_abs, tag = 'smem constant byte address 0x4 - core index']
  #allocation1 [shape = 'u32[144,128]{1,0:T(1,128)}', space=vmem, size = 0x12000, scoped, tag = 'internal scratch']
  %s0 = inlined_call_operand.hbm [shape: f32[8,8,128], index: 0, kind: input, shape index: {}]
  %s1 = inlined_call_operand.hbm [shape: f32[128,128], index: 1, kind: input, shape index: {}]
  %s2 = inlined_call_operand.vmem [shape: f32[1,128], index: 2, kind: input, shape index: {}]
  %s3 = inlined_call_operand.vmem [shape: f32[1,128], index: 3, kind: input, shape index: {}]
  %s4 = inlined_call_operand.vmem [shape: f32[1,128], index: 4, kind: input, shape index: {}]
  %s5 = inlined_call_operand.hbm [shape: f32[128,128], index: 5, kind: input, shape index: {}]
  %s6 = inlined_call_operand.vmem [shape: f32[1,128], index: 6, kind: input, shape index: {}]
  %s7 = inlined_call_operand.hbm [shape: f32[8,128], index: 7, kind: output, shape index: {}]
  %s8 = sld [smem:[#allocation0]]
  $region50: #{tpu_custom_call.1} parent=0
    _
  %s10 = ssub.s32 1, %s8
  %s11 = scalar_select 0, %s10, %s8
  $region1: #{tpu_custom_call.1} parent=0
    #allocation2 [shape = 'u8[32768]{0}', space=vmem, size = 0x8000, scoped, tag = 'input window, operand 0, single buffered']
    #allocation3 [shape = 's32[1]{0}', space=sflag, size = 0x4, scoped, tag = 'scoped memory for tpu_custom_call.1']
    #allocation4 [shape = 's32[1]{0}', space=sflag, size = 0x4, scoped, tag = 'scoped memory for tpu_custom_call.1']
    #allocation5 [shape = 'u8[65536]{0}', space=vmem, size = 0x10000, scoped, tag = 'input window, operand 1, single buffered']
    #allocation6 [shape = 's32[1]{0}', space=sflag, size = 0x4, scoped, tag = 'scoped memory for tpu_custom_call.1']
    #allocation7 [shape = 'u8[65536]{0}', space=vmem, size = 0x10000, scoped, tag = 'input window, operand 5, single buffered']
    #allocation8 [shape = 'u8[4096]{0}', space=vmem, size = 0x1000, scoped, tag = 'output window, operand 0, single buffered']
    %12 = vsyncpa [#allocation3], 0
    %13 = vsyncpa [#allocation6], 0
    %14 = vsyncpa [#allocation4], 0
    // Predicated region
    $region2: #{tpu_custom_call.1} parent=1 // pred_check
      _
    $region3: #{tpu_custom_call.1} parent=1 // pred_check_branch
      %16 = sbr.rel (0) target = $region5
    $region4: #{tpu_custom_call.1} parent=1 // pred_region
      %s18 = ssub.s32 1024, 1024
      %19 = vsyncadd [#allocation3], %s18
      %s20 = sshll.u32 [#allocation2], 4
      %s21 = int_to_ptr.vmem [resolvable:$true] %s20
      %26 = dma.hbm_to_vmem [thread:$0]  %s0, 1024, %s21, [#allocation3], 128, 128, 8
    $region5: #{tpu_custom_call.1} parent=1 // pred_fallthru
      _
    // Predicated region
    $region6: #{tpu_custom_call.1} parent=1 // pred_check
      _
    $region7: #{tpu_custom_call.1} parent=1 // pred_check_branch
      %28 = sbr.rel (0) target = $region9
    $region8: #{tpu_custom_call.1} parent=1 // pred_region
      %s30 = ssub.s32 2048, 2048
      %31 = vsyncadd [#allocation6], %s30
      %s32 = sshll.u32 [#allocation5], 4
      %s33 = int_to_ptr.vmem [resolvable:$true] %s32
      %38 = dma.hbm_to_vmem [thread:$0]  %s1, 2048, %s33, [#allocation6], 128, 128, 8
    $region9: #{tpu_custom_call.1} parent=1 // pred_fallthru
      _
    // Predicated region
    $region10: #{tpu_custom_call.1} parent=1 // pred_check
      _
    $region11: #{tpu_custom_call.1} parent=1 // pred_check_branch
      %40 = sbr.rel (0) target = $region13
    $region12: #{tpu_custom_call.1} parent=1 // pred_region
      _
    $region13: #{tpu_custom_call.1} parent=1 // pred_fallthru
      _
    // Predicated region
    $region14: #{tpu_custom_call.1} parent=1 // pred_check
      _
    $region15: #{tpu_custom_call.1} parent=1 // pred_check_branch
      %42 = sbr.rel (0) target = $region17
    $region16: #{tpu_custom_call.1} parent=1 // pred_region
      _
    $region17: #{tpu_custom_call.1} parent=1 // pred_fallthru
      _
    // Predicated region
    $region18: #{tpu_custom_call.1} parent=1 // pred_check
      _
    $region19: #{tpu_custom_call.1} parent=1 // pred_check_branch
      %44 = sbr.rel (0) target = $region21
    $region20: #{tpu_custom_call.1} parent=1 // pred_region
      _
    $region21: #{tpu_custom_call.1} parent=1 // pred_fallthru
      _
    // Predicated region
    $region22: #{tpu_custom_call.1} parent=1 // pred_check
      _
    $region23: #{tpu_custom_call.1} parent=1 // pred_check_branch
      %46 = sbr.rel (0) target = $region25
    $region24: #{tpu_custom_call.1} parent=1 // pred_region
      %s48 = ssub.s32 2048, 2048
      %49 = vsyncadd [#allocation6], %s48
      %s50 = sshll.u32 [#allocation7], 4
      %s51 = int_to_ptr.vmem [resolvable:$true] %s50
      %56 = dma.hbm_to_vmem [thread:$0]  %s5, 2048, %s51, [#allocation6], 128, 128, 8
    $region25: #{tpu_custom_call.1} parent=1 // pred_fallthru
      _
    // Predicated region
    $region26: #{tpu_custom_call.1} parent=1 // pred_check
      _
    $region27: #{tpu_custom_call.1} parent=1 // pred_check_branch
      %58 = sbr.rel (0) target = $region29
    $region28: #{tpu_custom_call.1} parent=1 // pred_region
      _
    $region29: #{tpu_custom_call.1} parent=1 // pred_fallthru
      _
    // Predicated region
    $region30: #{tpu_custom_call.1} parent=1 // pred_check
      _
    $region31: #{tpu_custom_call.1} parent=1 // pred_check_branch
      %60 = sbr.rel (0) target = $region33
    $region32: #{tpu_custom_call.1} parent=1 // pred_region
      %61 = dma.done [#allocation3], 1024
    $region33: #{tpu_custom_call.1} parent=1 // pred_fallthru
      _
    // Predicated region
    $region34: #{tpu_custom_call.1} parent=1 // pred_check
      _
    $region35: #{tpu_custom_call.1} parent=1 // pred_check_branch
      %63 = sbr.rel (0) target = $region37
    $region36: #{tpu_custom_call.1} parent=1 // pred_region
      %64 = dma.done [#allocation6], 2048
    $region37: #{tpu_custom_call.1} parent=1 // pred_fallthru
      _
    // Predicated region
    $region38: #{tpu_custom_call.1} parent=1 // pred_check
      _
    $region39: #{tpu_custom_call.1} parent=1 // pred_check_branch
      %66 = sbr.rel (0) target = $region41
    $region40: #{tpu_custom_call.1} parent=1 // pred_region
      %67 = dma.done [#allocation6], 2048
    $region41: #{tpu_custom_call.1} parent=1 // pred_fallthru
      _
    %v68 = vld [vmem:[#allocation5] sm:$0xff]
    %v69 = vld [vmem:[#allocation5 + $0x8] sm:$0xff]
    %v70 = vld [vmem:[#allocation5 + $0x10] sm:$0xff]
    %v71 = vld [vmem:[#allocation5 + $0x18] sm:$0xff]
    %v72 = vld [vmem:[#allocation5 + $0x20] sm:$0xff]
    %v73 = vld [vmem:[#allocation5 + $0x28] sm:$0xff]
    %v74 = vld [vmem:[#allocation5 + $0x30] sm:$0xff]
    %v75 = vld [vmem:[#allocation5 + $0x38] sm:$0xff]
    %v76 = vld [vmem:[#allocation5 + $0x40] sm:$0xff]
    %v77 = vld [vmem:[#allocation5 + $0x48] sm:$0xff]
    %v78 = vld [vmem:[#allocation5 + $0x50] sm:$0xff]
    %v79 = vld [vmem:[#allocation5 + $0x58] sm:$0xff]
    %v80 = vld [vmem:[#allocation5 + $0x60] sm:$0xff]
    %v81 = vld [vmem:[#allocation5 + $0x68] sm:$0xff]
    %v82 = vld [vmem:[#allocation5 + $0x70] sm:$0xff]
    %v83 = vld [vmem:[#allocation5 + $0x78] sm:$0xff]
    %v84 = vld [vmem:[%s2] sm:$0x1]
    %v86 = vlaneseq
    %v87 = vshrl.u32 %v86, 7
    %v88 = vsub.s32 0, %v87
    %v89 = vrot.slane %v84, %v88
    %v91 = vld [vmem:[%s3] sm:$0x1]
    %v93 = vlaneseq
    %v94 = vshrl.u32 %v93, 7
    %v95 = vsub.s32 0, %v94
    %v96 = vrot.slane %v91, %v95
    %v98 = vld [vmem:[%s4] sm:$0x1]
    %v100 = vlaneseq
    %v101 = vshrl.u32 %v100, 7
    %v102 = vsub.s32 0, %v101
    %v103 = vrot.slane %v98, %v102
    %v105 = vld [vmem:[#allocation2] sm:$0x1]
    %v106 = vld [vmem:[#allocation2 + $0x8] sm:$0x1]
    %v107 = vld [vmem:[#allocation2 + $0x10] sm:$0x1]
    %v108 = vld [vmem:[#allocation2 + $0x18] sm:$0x1]
    %v109 = vld [vmem:[#allocation2 + $0x20] sm:$0x1]
    %v110 = vld [vmem:[#allocation2 + $0x28] sm:$0x1]
    %v111 = vld [vmem:[#allocation2 + $0x30] sm:$0x1]
    %v112 = vld [vmem:[#allocation2 + $0x38] sm:$0x1]
    %v121 = vrot.slane %v106, 7
    %vm122 = vcmask 1041409
    %v123 = vsel %vm122, %v121, %v105
    %v124 = vrot.slane %v107, 6
    %vm125 = vcmask 1042434
    %v126 = vsel %vm125, %v124, %v123
    %v127 = vrot.slane %v108, 5
    %vm128 = vcmask 1043459
    %v129 = vsel %vm128, %v127, %v126
    %v130 = vrot.slane %v109, 4
    %vm131 = vcmask 1044484
    %v132 = vsel %vm131, %v130, %v129
    %v133 = vrot.slane %v110, 3
    %vm134 = vcmask 1045509
    %v135 = vsel %vm134, %v133, %v132
    %v136 = vrot.slane %v111, 2
    %vm137 = vcmask 1046534
    %v138 = vsel %vm137, %v136, %v135
    %v139 = vrot.slane %v112, 1
    %vm140 = vcmask 1047559
    %v141 = vsel %vm140, %v139, %v138
    %143 = vmatprep.subr.mxu0 0.0
    %144 = vmatpush1.msra.mxu0 %v68
    %145 = vmatprep.subr.mxu0 0.0
    %146 = vmatpush1.msra.mxu0 %v69
    %147 = vmatprep.subr.mxu0 0.0
    %148 = vmatpush1.msra.mxu0 %v70
    %149 = vmatprep.subr.mxu0 0.0
    %150 = vmatpush1.msra.mxu0 %v71
    %151 = vmatprep.subr.mxu0 0.0
    %152 = vmatpush1.msra.mxu0 %v72
    %153 = vmatprep.subr.mxu0 0.0
    %154 = vmatpush1.msra.mxu0 %v73
    %155 = vmatprep.subr.mxu0 0.0
    %156 = vmatpush1.msra.mxu0 %v74
    %157 = vmatprep.subr.mxu0 0.0
    %158 = vmatpush1.msra.mxu0 %v75
    %159 = vmatprep.subr.mxu0 0.0
    %160 = vmatpush1.msra.mxu0 %v76
    %161 = vmatprep.subr.mxu0 0.0
    %162 = vmatpush1.msra.mxu0 %v77
    %163 = vmatprep.subr.mxu0 0.0
    %164 = vmatpush1.msra.mxu0 %v78
    %165 = vmatprep.subr.mxu0 0.0
    %166 = vmatpush1.msra.mxu0 %v79
    %167 = vmatprep.subr.mxu0 0.0
    %168 = vmatpush1.msra.mxu0 %v80
    %169 = vmatprep.subr.mxu0 0.0
    %170 = vmatpush1.msra.mxu0 %v81
    %171 = vmatprep.subr.mxu0 0.0
    %172 = vmatpush1.msra.mxu0 %v82
    %173 = vmatprep.subr.mxu0 0.0
    %174 = vmatpush1.msra.mxu0 %v83
    %175 = vmatprep.subr.mxu0 0.0
    %176 = vmatpush1.msra.mxu0 0.0
    %177 = vmatprep.subr.mxu0 0.0
    %178 = vmatpush1.msra.mxu0 0.0
    %179 = vmatprep.subr.mxu0 0.0
    %180 = vmatpush1.msra.mxu0 0.0
    %181 = vmatprep.subr.mxu0 0.0
    %182 = vmatpush1.msra.mxu0 0.0
    %183 = vmatprep.subr.mxu0 0.0
    %184 = vmatpush1.msra.mxu0 0.0
    %185 = vmatprep.subr.mxu0 0.0
    %186 = vmatpush1.msra.mxu0 0.0
    %187 = vmatprep.subr.mxu0 0.0
    %188 = vmatpush1.msra.mxu0 0.0
    %189 = vmatprep.subr.mxu0 0.0
    %190 = vmatpush1.msra.mxu0 0.0
    %191 = vmatprep.subr.mxu0 0.0
    %192 = vmatpush1.msra.mxu0 0.0
    %193 = vmatprep.subr.mxu0 0.0
    %194 = vmatpush1.msra.mxu0 0.0
    %195 = vmatprep.subr.mxu0 0.0
    %196 = vmatpush1.msra.mxu0 0.0
    %197 = vmatprep.subr.mxu0 0.0
    %198 = vmatpush1.msra.mxu0 0.0
    %199 = vmatprep.subr.mxu0 0.0
    %200 = vmatpush1.msra.mxu0 0.0
    %201 = vmatprep.subr.mxu0 0.0
    %202 = vmatpush1.msra.mxu0 0.0
    %203 = vmatprep.subr.mxu0 0.0
    %204 = vmatpush1.msra.mxu0 0.0
    %205 = vmatprep.subr.mxu0 0.0
    %206 = vmatpush1.msra.mxu0 0.0
    %207 = vmatprep.mubr.f32.mxu0 0.0
    %208 = vmatmul.mubr.f32.gmra.mrb[0].mxu0 %v141
    %v209 = vpop.f32.mrb[0].mxu0
    %v210 = vadd.f32 %v89, %v209
    %v211 = vpop.f32.mrb[0].mxu0
    %212 = vdwg.mxu0
    %v213 = vmul.f32 %v103, 0.0
    %v214 = vtanh.pop %v210
    %v215 = vmul.f32 %v214, %v96
    %v216 = vadd.f32 %v213, %v215
    %v217 = vld [vmem:[#allocation2 + $0x1] sm:$0x1]
    %v218 = vld [vmem:[#allocation2 + $0x9] sm:$0x1]
    %v219 = vld [vmem:[#allocation2 + $0x11] sm:$0x1]
    %v220 = vld [vmem:[#allocation2 + $0x19] sm:$0x1]
    %v221 = vld [vmem:[#allocation2 + $0x21] sm:$0x1]
    %v222 = vld [vmem:[#allocation2 + $0x29] sm:$0x1]
    %v223 = vld [vmem:[#allocation2 + $0x31] sm:$0x1]
    %v224 = vld [vmem:[#allocation2 + $0x39] sm:$0x1]
    %v233 = vrot.slane %v218, 7
    %v234 = vsel %vm122, %v233, %v217
    %v235 = vrot.slane %v219, 6
    %v236 = vsel %vm125, %v235, %v234
    %v237 = vrot.slane %v220, 5
    %v238 = vsel %vm128, %v237, %v236
    %v239 = vrot.slane %v221, 4
    %v240 = vsel %vm131, %v239, %v238
    %v241 = vrot.slane %v222, 3
    %v242 = vsel %vm134, %v241, %v240
    %v243 = vrot.slane %v223, 2
    %v244 = vsel %vm137, %v243, %v242
    %v245 = vrot.slane %v224, 1
    %v246 = vsel %vm140, %v245, %v244
    %248 = vmatprep.subr.mxu0 0.0
    %249 = vmatpush1.msra.mxu0 %v68
    %250 = vmatprep.subr.mxu0 0.0
    %251 = vmatpush1.msra.mxu0 %v69
    %252 = vmatprep.subr.mxu0 0.0
    %253 = vmatpush1.msra.mxu0 %v70
    %254 = vmatprep.subr.mxu0 0.0
    %255 = vmatpush1.msra.mxu0 %v71
    %256 = vmatprep.subr.mxu0 0.0
    %257 = vmatpush1.msra.mxu0 %v72
    %258 = vmatprep.subr.mxu0 0.0
    %259 = vmatpush1.msra.mxu0 %v73
    %260 = vmatprep.subr.mxu0 0.0
    %261 = vmatpush1.msra.mxu0 %v74
    %262 = vmatprep.subr.mxu0 0.0
    %263 = vmatpush1.msra.mxu0 %v75
    %264 = vmatprep.subr.mxu0 0.0
    %265 = vmatpush1.msra.mxu0 %v76
    %266 = vmatprep.subr.mxu0 0.0
    %267 = vmatpush1.msra.mxu0 %v77
    %268 = vmatprep.subr.mxu0 0.0
    %269 = vmatpush1.msra.mxu0 %v78
    %270 = vmatprep.subr.mxu0 0.0
    %271 = vmatpush1.msra.mxu0 %v79
    %272 = vmatprep.subr.mxu0 0.0
    %273 = vmatpush1.msra.mxu0 %v80
    %274 = vmatprep.subr.mxu0 0.0
    %275 = vmatpush1.msra.mxu0 %v81
    %276 = vmatprep.subr.mxu0 0.0
    %277 = vmatpush1.msra.mxu0 %v82
    %278 = vmatprep.subr.mxu0 0.0
    %279 = vmatpush1.msra.mxu0 %v83
    %280 = vmatprep.subr.mxu0 0.0
    %281 = vmatpush1.msra.mxu0 0.0
    %282 = vmatprep.subr.mxu0 0.0
    %283 = vmatpush1.msra.mxu0 0.0
    %284 = vmatprep.subr.mxu0 0.0
    %285 = vmatpush1.msra.mxu0 0.0
    %286 = vmatprep.subr.mxu0 0.0
    %287 = vmatpush1.msra.mxu0 0.0
    %288 = vmatprep.subr.mxu0 0.0
    %289 = vmatpush1.msra.mxu0 0.0
    %290 = vmatprep.subr.mxu0 0.0
    %291 = vmatpush1.msra.mxu0 0.0
    %292 = vmatprep.subr.mxu0 0.0
    %293 = vmatpush1.msra.mxu0 0.0
    %294 = vmatprep.subr.mxu0 0.0
    %295 = vmatpush1.msra.mxu0 0.0
    %296 = vmatprep.subr.mxu0 0.0
    %297 = vmatpush1.msra.mxu0 0.0
    %298 = vmatprep.subr.mxu0 0.0
    %299 = vmatpush1.msra.mxu0 0.0
    %300 = vmatprep.subr.mxu0 0.0
    %301 = vmatpush1.msra.mxu0 0.0
    %302 = vmatprep.subr.mxu0 0.0
    %303 = vmatpush1.msra.mxu0 0.0
    %304 = vmatprep.subr.mxu0 0.0
    %305 = vmatpush1.msra.mxu0 0.0
    %306 = vmatprep.subr.mxu0 0.0
    %307 = vmatpush1.msra.mxu0 0.0
    %308 = vmatprep.subr.mxu0 0.0
    %309 = vmatpush1.msra.mxu0 0.0
    %310 = vmatprep.subr.mxu0 0.0
    %311 = vmatpush1.msra.mxu0 0.0
    %312 = vmatprep.mubr.f32.mxu0 0.0
    %313 = vmatmul.mubr.f32.gmra.mrb[0].mxu0 %v246
    %v314 = vpop.f32.mrb[0].mxu0
    %v315 = vadd.f32 %v89, %v314
    %v316 = vpop.f32.mrb[0].mxu0
    %317 = vdwg.mxu0
    %v318 = vmul.f32 %v216, %v103
    %v319 = vtanh.pop %v315
    %v320 = vmul.f32 %v319, %v96
    %v321 = vadd.f32 %v318, %v320
    %v322 = vld [vmem:[#allocation2 + $0x2] sm:$0x1]
    %v323 = vld [vmem:[#allocation2 + $0xa] sm:$0x1]
    %v324 = vld [vmem:[#allocation2 + $0x12] sm:$0x1]
    %v325 = vld [vmem:[#allocation2 + $0x1a] sm:$0x1]
    %v326 = vld [vmem:[#allocation2 + $0x22] sm:$0x1]
    %v327 = vld [vmem:[#allocation2 + $0x2a] sm:$0x1]
    %v328 = vld [vmem:[#allocation2 + $0x32] sm:$0x1]
    %v329 = vld [vmem:[#allocation2 + $0x3a] sm:$0x1]
    %v338 = vrot.slane %v323, 7
    %v339 = vsel %vm122, %v338, %v322
    %v340 = vrot.slane %v324, 6
    %v341 = vsel %vm125, %v340, %v339
    %v342 = vrot.slane %v325, 5
    %v343 = vsel %vm128, %v342, %v341
    %v344 = vrot.slane %v326, 4
    %v345 = vsel %vm131, %v344, %v343
    %v346 = vrot.slane %v327, 3
    %v347 = vsel %vm134, %v346, %v345
    %v348 = vrot.slane %v328, 2
    %v349 = vsel %vm137, %v348, %v347
    %v350 = vrot.slane %v329, 1
    %v351 = vsel %vm140, %v350, %v349
    %353 = vmatprep.subr.mxu0 0.0
    %354 = vmatpush1.msra.mxu0 %v68
    %355 = vmatprep.subr.mxu0 0.0
    %356 = vmatpush1.msra.mxu0 %v69
    %357 = vmatprep.subr.mxu0 0.0
    %358 = vmatpush1.msra.mxu0 %v70
    %359 = vmatprep.subr.mxu0 0.0
    %360 = vmatpush1.msra.mxu0 %v71
    %361 = vmatprep.subr.mxu0 0.0
    %362 = vmatpush1.msra.mxu0 %v72
    %363 = vmatprep.subr.mxu0 0.0
    %364 = vmatpush1.msra.mxu0 %v73
    %365 = vmatprep.subr.mxu0 0.0
    %366 = vmatpush1.msra.mxu0 %v74
    %367 = vmatprep.subr.mxu0 0.0
    %368 = vmatpush1.msra.mxu0 %v75
    %369 = vmatprep.subr.mxu0 0.0
    %370 = vmatpush1.msra.mxu0 %v76
    %371 = vmatprep.subr.mxu0 0.0
    %372 = vmatpush1.msra.mxu0 %v77
    %373 = vmatprep.subr.mxu0 0.0
    %374 = vmatpush1.msra.mxu0 %v78
    %375 = vmatprep.subr.mxu0 0.0
    %376 = vmatpush1.msra.mxu0 %v79
    %377 = vmatprep.subr.mxu0 0.0
    %378 = vmatpush1.msra.mxu0 %v80
    %379 = vmatprep.subr.mxu0 0.0
    %380 = vmatpush1.msra.mxu0 %v81
    %381 = vmatprep.subr.mxu0 0.0
    %382 = vmatpush1.msra.mxu0 %v82
    %383 = vmatprep.subr.mxu0 0.0
    %384 = vmatpush1.msra.mxu0 %v83
    %385 = vmatprep.subr.mxu0 0.0
    %386 = vmatpush1.msra.mxu0 0.0
    %387 = vmatprep.subr.mxu0 0.0
    %388 = vmatpush1.msra.mxu0 0.0
    %389 = vmatprep.subr.mxu0 0.0
    %390 = vmatpush1.msra.mxu0 0.0
    %391 = vmatprep.subr.mxu0 0.0
    %392 = vmatpush1.msra.mxu0 0.0
    %393 = vmatprep.subr.mxu0 0.0
    %394 = vmatpush1.msra.mxu0 0.0
    %395 = vmatprep.subr.mxu0 0.0
    %396 = vmatpush1.msra.mxu0 0.0
    %397 = vmatprep.subr.mxu0 0.0
    %398 = vmatpush1.msra.mxu0 0.0
    %399 = vmatprep.subr.mxu0 0.0
    %400 = vmatpush1.msra.mxu0 0.0
    %401 = vmatprep.subr.mxu0 0.0
    %402 = vmatpush1.msra.mxu0 0.0
    %403 = vmatprep.subr.mxu0 0.0
    %404 = vmatpush1.msra.mxu0 0.0
    %405 = vmatprep.subr.mxu0 0.0
    %406 = vmatpush1.msra.mxu0 0.0
    %407 = vmatprep.subr.mxu0 0.0
    %408 = vmatpush1.msra.mxu0 0.0
    %409 = vmatprep.subr.mxu0 0.0
    %410 = vmatpush1.msra.mxu0 0.0
    %411 = vmatprep.subr.mxu0 0.0
    %412 = vmatpush1.msra.mxu0 0.0
    %413 = vmatprep.subr.mxu0 0.0
    %414 = vmatpush1.msra.mxu0 0.0
    %415 = vmatprep.subr.mxu0 0.0
    %416 = vmatpush1.msra.mxu0 0.0
    %417 = vmatprep.mubr.f32.mxu0 0.0
    %418 = vmatmul.mubr.f32.gmra.mrb[0].mxu0 %v351
    %v419 = vpop.f32.mrb[0].mxu0
    %v420 = vadd.f32 %v89, %v419
    %v421 = vpop.f32.mrb[0].mxu0
    %422 = vdwg.mxu0
    %v423 = vmul.f32 %v321, %v103
    %v424 = vtanh.pop %v420
    %v425 = vmul.f32 %v424, %v96
    %v426 = vadd.f32 %v423, %v425
    %v427 = vld [vmem:[#allocation2 + $0x3] sm:$0x1]
    %v428 = vld [vmem:[#allocation2 + $0xb] sm:$0x1]
    %v429 = vld [vmem:[#allocation2 + $0x13] sm:$0x1]
    %v430 = vld [vmem:[#allocation2 + $0x1b] sm:$0x1]
    %v431 = vld [vmem:[#allocation2 + $0x23] sm:$0x1]
    %v432 = vld [vmem:[#allocation2 + $0x2b] sm:$0x1]
    %v433 = vld [vmem:[#allocation2 + $0x33] sm:$0x1]
    %v434 = vld [vmem:[#allocation2 + $0x3b] sm:$0x1]
    %v443 = vrot.slane %v428, 7
    %v444 = vsel %vm122, %v443, %v427
    %v445 = vrot.slane %v429, 6
    %v446 = vsel %vm125, %v445, %v444
    %v447 = vrot.slane %v430, 5
    %v448 = vsel %vm128, %v447, %v446
    %v449 = vrot.slane %v431, 4
    %v450 = vsel %vm131, %v449, %v448
    %v451 = vrot.slane %v432, 3
    %v452 = vsel %vm134, %v451, %v450
    %v453 = vrot.slane %v433, 2
    %v454 = vsel %vm137, %v453, %v452
    %v455 = vrot.slane %v434, 1
    %v456 = vsel %vm140, %v455, %v454
    %458 = vmatprep.subr.mxu0 0.0
    %459 = vmatpush1.msra.mxu0 %v68
    %460 = vmatprep.subr.mxu0 0.0
    %461 = vmatpush1.msra.mxu0 %v69
    %462 = vmatprep.subr.mxu0 0.0
    %463 = vmatpush1.msra.mxu0 %v70
    %464 = vmatprep.subr.mxu0 0.0
    %465 = vmatpush1.msra.mxu0 %v71
    %466 = vmatprep.subr.mxu0 0.0
    %467 = vmatpush1.msra.mxu0 %v72
    %468 = vmatprep.subr.mxu0 0.0
    %469 = vmatpush1.msra.mxu0 %v73
    %470 = vmatprep.subr.mxu0 0.0
    %471 = vmatpush1.msra.mxu0 %v74
    %472 = vmatprep.subr.mxu0 0.0
    %473 = vmatpush1.msra.mxu0 %v75
    %474 = vmatprep.subr.mxu0 0.0
    %475 = vmatpush1.msra.mxu0 %v76
    %476 = vmatprep.subr.mxu0 0.0
    %477 = vmatpush1.msra.mxu0 %v77
    %478 = vmatprep.subr.mxu0 0.0
    %479 = vmatpush1.msra.mxu0 %v78
    %480 = vmatprep.subr.mxu0 0.0
    %481 = vmatpush1.msra.mxu0 %v79
    %482 = vmatprep.subr.mxu0 0.0
    %483 = vmatpush1.msra.mxu0 %v80
    %484 = vmatprep.subr.mxu0 0.0
    %485 = vmatpush1.msra.mxu0 %v81
    %486 = vmatprep.subr.mxu0 0.0
    %487 = vmatpush1.msra.mxu0 %v82
    %488 = vmatprep.subr.mxu0 0.0
    %489 = vmatpush1.msra.mxu0 %v83
    %490 = vmatprep.subr.mxu0 0.0
    %491 = vmatpush1.msra.mxu0 0.0
    %492 = vmatprep.subr.mxu0 0.0
    %493 = vmatpush1.msra.mxu0 0.0
    %494 = vmatprep.subr.mxu0 0.0
    %495 = vmatpush1.msra.mxu0 0.0
    %496 = vmatprep.subr.mxu0 0.0
    %497 = vmatpush1.msra.mxu0 0.0
    %498 = vmatprep.subr.mxu0 0.0
    %499 = vmatpush1.msra.mxu0 0.0
    %500 = vmatprep.subr.mxu0 0.0
    %501 = vmatpush1.msra.mxu0 0.0
    %502 = vmatprep.subr.mxu0 0.0
    %503 = vmatpush1.msra.mxu0 0.0
    %504 = vmatprep.subr.mxu0 0.0
    %505 = vmatpush1.msra.mxu0 0.0
    %506 = vmatprep.subr.mxu0 0.0
    %507 = vmatpush1.msra.mxu0 0.0
    %508 = vmatprep.subr.mxu0 0.0
    %509 = vmatpush1.msra.mxu0 0.0
    %510 = vmatprep.subr.mxu0 0.0
    %511 = vmatpush1.msra.mxu0 0.0
    %512 = vmatprep.subr.mxu0 0.0
    %513 = vmatpush1.msra.mxu0 0.0
    %514 = vmatprep.subr.mxu0 0.0
    %515 = vmatpush1.msra.mxu0 0.0
    %516 = vmatprep.subr.mxu0 0.0
    %517 = vmatpush1.msra.mxu0 0.0
    %518 = vmatprep.subr.mxu0 0.0
    %519 = vmatpush1.msra.mxu0 0.0
    %520 = vmatprep.subr.mxu0 0.0
    %521 = vmatpush1.msra.mxu0 0.0
    %522 = vmatprep.mubr.f32.mxu0 0.0
    %523 = vmatmul.mubr.f32.gmra.mrb[0].mxu0 %v456
    %v524 = vpop.f32.mrb[0].mxu0
    %v525 = vadd.f32 %v89, %v524
    %v526 = vpop.f32.mrb[0].mxu0
    %527 = vdwg.mxu0
    %v528 = vmul.f32 %v426, %v103
    %v529 = vtanh.pop %v525
    %v530 = vmul.f32 %v529, %v96
    %v531 = vadd.f32 %v528, %v530
    %v532 = vld [vmem:[#allocation2 + $0x4] sm:$0x1]
    %v533 = vld [vmem:[#allocation2 + $0xc] sm:$0x1]
    %v534 = vld [vmem:[#allocation2 + $0x14] sm:$0x1]
    %v535 = vld [vmem:[#allocation2 + $0x1c] sm:$0x1]
    %v536 = vld [vmem:[#allocation2 + $0x24] sm:$0x1]
    %v537 = vld [vmem:[#allocation2 + $0x2c] sm:$0x1]
    %v538 = vld [vmem:[#allocation2 + $0x34] sm:$0x1]
    %v539 = vld [vmem:[#allocation2 + $0x3c] sm:$0x1]
    %v548 = vrot.slane %v533, 7
    %v549 = vsel %vm122, %v548, %v532
    %v550 = vrot.slane %v534, 6
    %v551 = vsel %vm125, %v550, %v549
    %v552 = vrot.slane %v535, 5
    %v553 = vsel %vm128, %v552, %v551
    %v554 = vrot.slane %v536, 4
    %v555 = vsel %vm131, %v554, %v553
    %v556 = vrot.slane %v537, 3
    %v557 = vsel %vm134, %v556, %v555
    %v558 = vrot.slane %v538, 2
    %v559 = vsel %vm137, %v558, %v557
    %v560 = vrot.slane %v539, 1
    %v561 = vsel %vm140, %v560, %v559
    %563 = vmatprep.subr.mxu0 0.0
    %564 = vmatpush1.msra.mxu0 %v68
    %565 = vmatprep.subr.mxu0 0.0
    %566 = vmatpush1.msra.mxu0 %v69
    %567 = vmatprep.subr.mxu0 0.0
    %568 = vmatpush1.msra.mxu0 %v70
    %569 = vmatprep.subr.mxu0 0.0
    %570 = vmatpush1.msra.mxu0 %v71
    %571 = vmatprep.subr.mxu0 0.0
    %572 = vmatpush1.msra.mxu0 %v72
    %573 = vmatprep.subr.mxu0 0.0
    %574 = vmatpush1.msra.mxu0 %v73
    %575 = vmatprep.subr.mxu0 0.0
    %576 = vmatpush1.msra.mxu0 %v74
    %577 = vmatprep.subr.mxu0 0.0
    %578 = vmatpush1.msra.mxu0 %v75
    %579 = vmatprep.subr.mxu0 0.0
    %580 = vmatpush1.msra.mxu0 %v76
    %581 = vmatprep.subr.mxu0 0.0
    %582 = vmatpush1.msra.mxu0 %v77
    %583 = vmatprep.subr.mxu0 0.0
    %584 = vmatpush1.msra.mxu0 %v78
    %585 = vmatprep.subr.mxu0 0.0
    %586 = vmatpush1.msra.mxu0 %v79
    %587 = vmatprep.subr.mxu0 0.0
    %588 = vmatpush1.msra.mxu0 %v80
    %589 = vmatprep.subr.mxu0 0.0
    %590 = vmatpush1.msra.mxu0 %v81
    %591 = vmatprep.subr.mxu0 0.0
    %592 = vmatpush1.msra.mxu0 %v82
    %593 = vmatprep.subr.mxu0 0.0
    %594 = vmatpush1.msra.mxu0 %v83
    %595 = vmatprep.subr.mxu0 0.0
    %596 = vmatpush1.msra.mxu0 0.0
    %597 = vmatprep.subr.mxu0 0.0
    %598 = vmatpush1.msra.mxu0 0.0
    %599 = vmatprep.subr.mxu0 0.0
    %600 = vmatpush1.msra.mxu0 0.0
    %601 = vmatprep.subr.mxu0 0.0
    %602 = vmatpush1.msra.mxu0 0.0
    %603 = vmatprep.subr.mxu0 0.0
    %604 = vmatpush1.msra.mxu0 0.0
    %605 = vmatprep.subr.mxu0 0.0
    %606 = vmatpush1.msra.mxu0 0.0
    %607 = vmatprep.subr.mxu0 0.0
    %608 = vmatpush1.msra.mxu0 0.0
    %609 = vmatprep.subr.mxu0 0.0
    %610 = vmatpush1.msra.mxu0 0.0
    %611 = vmatprep.subr.mxu0 0.0
    %612 = vmatpush1.msra.mxu0 0.0
    %613 = vmatprep.subr.mxu0 0.0
    %614 = vmatpush1.msra.mxu0 0.0
    %615 = vmatprep.subr.mxu0 0.0
    %616 = vmatpush1.msra.mxu0 0.0
    %617 = vmatprep.subr.mxu0 0.0
    %618 = vmatpush1.msra.mxu0 0.0
    %619 = vmatprep.subr.mxu0 0.0
    %620 = vmatpush1.msra.mxu0 0.0
    %621 = vmatprep.subr.mxu0 0.0
    %622 = vmatpush1.msra.mxu0 0.0
    %623 = vmatprep.subr.mxu0 0.0
    %624 = vmatpush1.msra.mxu0 0.0
    %625 = vmatprep.subr.mxu0 0.0
    %626 = vmatpush1.msra.mxu0 0.0
    %627 = vmatprep.mubr.f32.mxu0 0.0
    %628 = vmatmul.mubr.f32.gmra.mrb[0].mxu0 %v561
    %v629 = vpop.f32.mrb[0].mxu0
    %v630 = vadd.f32 %v89, %v629
    %v631 = vpop.f32.mrb[0].mxu0
    %632 = vdwg.mxu0
    %v633 = vmul.f32 %v531, %v103
    %v634 = vtanh.pop %v630
    %v635 = vmul.f32 %v634, %v96
    %v636 = vadd.f32 %v633, %v635
    %v637 = vld [vmem:[#allocation2 + $0x5] sm:$0x1]
    %v638 = vld [vmem:[#allocation2 + $0xd] sm:$0x1]
    %v639 = vld [vmem:[#allocation2 + $0x15] sm:$0x1]
    %v640 = vld [vmem:[#allocation2 + $0x1d] sm:$0x1]
    %v641 = vld [vmem:[#allocation2 + $0x25] sm:$0x1]
    %v642 = vld [vmem:[#allocation2 + $0x2d] sm:$0x1]
    %v643 = vld [vmem:[#allocation2 + $0x35] sm:$0x1]
    %v644 = vld [vmem:[#allocation2 + $0x3d] sm:$0x1]
    %v653 = vrot.slane %v638, 7
    %v654 = vsel %vm122, %v653, %v637
    %v655 = vrot.slane %v639, 6
    %v656 = vsel %vm125, %v655, %v654
    %v657 = vrot.slane %v640, 5
    %v658 = vsel %vm128, %v657, %v656
    %v659 = vrot.slane %v641, 4
    %v660 = vsel %vm131, %v659, %v658
    %v661 = vrot.slane %v642, 3
    %v662 = vsel %vm134, %v661, %v660
    %v663 = vrot.slane %v643, 2
    %v664 = vsel %vm137, %v663, %v662
    %v665 = vrot.slane %v644, 1
    %v666 = vsel %vm140, %v665, %v664
    %668 = vmatprep.subr.mxu0 0.0
    %669 = vmatpush1.msra.mxu0 %v68
    %670 = vmatprep.subr.mxu0 0.0
    %671 = vmatpush1.msra.mxu0 %v69
    %672 = vmatprep.subr.mxu0 0.0
    %673 = vmatpush1.msra.mxu0 %v70
    %674 = vmatprep.subr.mxu0 0.0
    %675 = vmatpush1.msra.mxu0 %v71
    %676 = vmatprep.subr.mxu0 0.0
    %677 = vmatpush1.msra.mxu0 %v72
    %678 = vmatprep.subr.mxu0 0.0
    %679 = vmatpush1.msra.mxu0 %v73
    %680 = vmatprep.subr.mxu0 0.0
    %681 = vmatpush1.msra.mxu0 %v74
    %682 = vmatprep.subr.mxu0 0.0
    %683 = vmatpush1.msra.mxu0 %v75
    %684 = vmatprep.subr.mxu0 0.0
    %685 = vmatpush1.msra.mxu0 %v76
    %686 = vmatprep.subr.mxu0 0.0
    %687 = vmatpush1.msra.mxu0 %v77
    %688 = vmatprep.subr.mxu0 0.0
    %689 = vmatpush1.msra.mxu0 %v78
    %690 = vmatprep.subr.mxu0 0.0
    %691 = vmatpush1.msra.mxu0 %v79
    %692 = vmatprep.subr.mxu0 0.0
    %693 = vmatpush1.msra.mxu0 %v80
    %694 = vmatprep.subr.mxu0 0.0
    %695 = vmatpush1.msra.mxu0 %v81
    %696 = vmatprep.subr.mxu0 0.0
    %697 = vmatpush1.msra.mxu0 %v82
    %698 = vmatprep.subr.mxu0 0.0
    %699 = vmatpush1.msra.mxu0 %v83
    %700 = vmatprep.subr.mxu0 0.0
    %701 = vmatpush1.msra.mxu0 0.0
    %702 = vmatprep.subr.mxu0 0.0
    %703 = vmatpush1.msra.mxu0 0.0
    %704 = vmatprep.subr.mxu0 0.0
    %705 = vmatpush1.msra.mxu0 0.0
    %706 = vmatprep.subr.mxu0 0.0
    %707 = vmatpush1.msra.mxu0 0.0
    %708 = vmatprep.subr.mxu0 0.0
    %709 = vmatpush1.msra.mxu0 0.0
    %710 = vmatprep.subr.mxu0 0.0
    %711 = vmatpush1.msra.mxu0 0.0
    %712 = vmatprep.subr.mxu0 0.0
    %713 = vmatpush1.msra.mxu0 0.0
    %714 = vmatprep.subr.mxu0 0.0
    %715 = vmatpush1.msra.mxu0 0.0
    %716 = vmatprep.subr.mxu0 0.0
    %717 = vmatpush1.msra.mxu0 0.0
    %718 = vmatprep.subr.mxu0 0.0
    %719 = vmatpush1.msra.mxu0 0.0
    %720 = vmatprep.subr.mxu0 0.0
    %721 = vmatpush1.msra.mxu0 0.0
    %722 = vmatprep.subr.mxu0 0.0
    %723 = vmatpush1.msra.mxu0 0.0
    %724 = vmatprep.subr.mxu0 0.0
    %725 = vmatpush1.msra.mxu0 0.0
    %726 = vmatprep.subr.mxu0 0.0
    %727 = vmatpush1.msra.mxu0 0.0
    %728 = vmatprep.subr.mxu0 0.0
    %729 = vmatpush1.msra.mxu0 0.0
    %730 = vmatprep.subr.mxu0 0.0
    %731 = vmatpush1.msra.mxu0 0.0
    %732 = vmatprep.mubr.f32.mxu0 0.0
    %733 = vmatmul.mubr.f32.gmra.mrb[0].mxu0 %v666
    %v734 = vpop.f32.mrb[0].mxu0
    %v735 = vadd.f32 %v89, %v734
    %v736 = vpop.f32.mrb[0].mxu0
    %737 = vdwg.mxu0
    %v738 = vmul.f32 %v636, %v103
    %v739 = vtanh.pop %v735
    %v740 = vmul.f32 %v739, %v96
    %v741 = vadd.f32 %v738, %v740
    %v742 = vld [vmem:[#allocation2 + $0x6] sm:$0x1]
    %v743 = vld [vmem:[#allocation2 + $0xe] sm:$0x1]
    %v744 = vld [vmem:[#allocation2 + $0x16] sm:$0x1]
    %v745 = vld [vmem:[#allocation2 + $0x1e] sm:$0x1]
    %v746 = vld [vmem:[#allocation2 + $0x26] sm:$0x1]
    %v747 = vld [vmem:[#allocation2 + $0x2e] sm:$0x1]
    %v748 = vld [vmem:[#allocation2 + $0x36] sm:$0x1]
    %v749 = vld [vmem:[#allocation2 + $0x3e] sm:$0x1]
    %v758 = vrot.slane %v743, 7
    %v759 = vsel %vm122, %v758, %v742
    %v760 = vrot.slane %v744, 6
    %v761 = vsel %vm125, %v760, %v759
    %v762 = vrot.slane %v745, 5
    %v763 = vsel %vm128, %v762, %v761
    %v764 = vrot.slane %v746, 4
    %v765 = vsel %vm131, %v764, %v763
    %v766 = vrot.slane %v747, 3
    %v767 = vsel %vm134, %v766, %v765
    %v768 = vrot.slane %v748, 2
    %v769 = vsel %vm137, %v768, %v767
    %v770 = vrot.slane %v749, 1
    %v771 = vsel %vm140, %v770, %v769
    %773 = vmatprep.subr.mxu0 0.0
    %774 = vmatpush1.msra.mxu0 %v68
    %775 = vmatprep.subr.mxu0 0.0
    %776 = vmatpush1.msra.mxu0 %v69
    %777 = vmatprep.subr.mxu0 0.0
    %778 = vmatpush1.msra.mxu0 %v70
    %779 = vmatprep.subr.mxu0 0.0
    %780 = vmatpush1.msra.mxu0 %v71
    %781 = vmatprep.subr.mxu0 0.0
    %782 = vmatpush1.msra.mxu0 %v72
    %783 = vmatprep.subr.mxu0 0.0
    %784 = vmatpush1.msra.mxu0 %v73
    %785 = vmatprep.subr.mxu0 0.0
    %786 = vmatpush1.msra.mxu0 %v74
    %787 = vmatprep.subr.mxu0 0.0
    %788 = vmatpush1.msra.mxu0 %v75
    %789 = vmatprep.subr.mxu0 0.0
    %790 = vmatpush1.msra.mxu0 %v76
    %791 = vmatprep.subr.mxu0 0.0
    %792 = vmatpush1.msra.mxu0 %v77
    %793 = vmatprep.subr.mxu0 0.0
    %794 = vmatpush1.msra.mxu0 %v78
    %795 = vmatprep.subr.mxu0 0.0
    %796 = vmatpush1.msra.mxu0 %v79
    %797 = vmatprep.subr.mxu0 0.0
    %798 = vmatpush1.msra.mxu0 %v80
    %799 = vmatprep.subr.mxu0 0.0
    %800 = vmatpush1.msra.mxu0 %v81
    %801 = vmatprep.subr.mxu0 0.0
    %802 = vmatpush1.msra.mxu0 %v82
    %803 = vmatprep.subr.mxu0 0.0
    %804 = vmatpush1.msra.mxu0 %v83
    %805 = vmatprep.subr.mxu0 0.0
    %806 = vmatpush1.msra.mxu0 0.0
    %807 = vmatprep.subr.mxu0 0.0
    %808 = vmatpush1.msra.mxu0 0.0
    %809 = vmatprep.subr.mxu0 0.0
    %810 = vmatpush1.msra.mxu0 0.0
    %811 = vmatprep.subr.mxu0 0.0
    %812 = vmatpush1.msra.mxu0 0.0
    %813 = vmatprep.subr.mxu0 0.0
    %814 = vmatpush1.msra.mxu0 0.0
    %815 = vmatprep.subr.mxu0 0.0
    %816 = vmatpush1.msra.mxu0 0.0
    %817 = vmatprep.subr.mxu0 0.0
    %818 = vmatpush1.msra.mxu0 0.0
    %819 = vmatprep.subr.mxu0 0.0
    %820 = vmatpush1.msra.mxu0 0.0
    %821 = vmatprep.subr.mxu0 0.0
    %822 = vmatpush1.msra.mxu0 0.0
    %823 = vmatprep.subr.mxu0 0.0
    %824 = vmatpush1.msra.mxu0 0.0
    %825 = vmatprep.subr.mxu0 0.0
    %826 = vmatpush1.msra.mxu0 0.0
    %827 = vmatprep.subr.mxu0 0.0
    %828 = vmatpush1.msra.mxu0 0.0
    %829 = vmatprep.subr.mxu0 0.0
    %830 = vmatpush1.msra.mxu0 0.0
    %831 = vmatprep.subr.mxu0 0.0
    %832 = vmatpush1.msra.mxu0 0.0
    %833 = vmatprep.subr.mxu0 0.0
    %834 = vmatpush1.msra.mxu0 0.0
    %835 = vmatprep.subr.mxu0 0.0
    %836 = vmatpush1.msra.mxu0 0.0
    %837 = vmatprep.mubr.f32.mxu0 0.0
    %838 = vmatmul.mubr.f32.gmra.mrb[0].mxu0 %v771
    %v839 = vpop.f32.mrb[0].mxu0
    %v840 = vadd.f32 %v89, %v839
    %v841 = vpop.f32.mrb[0].mxu0
    %842 = vdwg.mxu0
    %v843 = vmul.f32 %v741, %v103
    %v844 = vtanh.pop %v840
    %v845 = vmul.f32 %v844, %v96
    %v846 = vadd.f32 %v843, %v845
    %v847 = vld [vmem:[#allocation2 + $0x7] sm:$0x1]
    %v848 = vld [vmem:[#allocation2 + $0xf] sm:$0x1]
    %v849 = vld [vmem:[#allocation2 + $0x17] sm:$0x1]
    %v850 = vld [vmem:[#allocation2 + $0x1f] sm:$0x1]
    %v851 = vld [vmem:[#allocation2 + $0x27] sm:$0x1]
    %v852 = vld [vmem:[#allocation2 + $0x2f] sm:$0x1]
    %v853 = vld [vmem:[#allocation2 + $0x37] sm:$0x1]
    %v854 = vld [vmem:[#allocation2 + $0x3f] sm:$0x1]
    %v863 = vrot.slane %v848, 7
    %v864 = vsel %vm122, %v863, %v847
    %v865 = vrot.slane %v849, 6
    %v866 = vsel %vm125, %v865, %v864
    %v867 = vrot.slane %v850, 5
    %v868 = vsel %vm128, %v867, %v866
    %v869 = vrot.slane %v851, 4
    %v870 = vsel %vm131, %v869, %v868
    %v871 = vrot.slane %v852, 3
    %v872 = vsel %vm134, %v871, %v870
    %v873 = vrot.slane %v853, 2
    %v874 = vsel %vm137, %v873, %v872
    %v875 = vrot.slane %v854, 1
    %v876 = vsel %vm140, %v875, %v874
    %878 = vmatprep.subr.mxu0 0.0
    %879 = vmatpush1.msra.mxu0 %v68
    %880 = vmatprep.subr.mxu0 0.0
    %881 = vmatpush1.msra.mxu0 %v69
    %882 = vmatprep.subr.mxu0 0.0
    %883 = vmatpush1.msra.mxu0 %v70
    %884 = vmatprep.subr.mxu0 0.0
    %885 = vmatpush1.msra.mxu0 %v71
    %886 = vmatprep.subr.mxu0 0.0
    %887 = vmatpush1.msra.mxu0 %v72
    %888 = vmatprep.subr.mxu0 0.0
    %889 = vmatpush1.msra.mxu0 %v73
    %890 = vmatprep.subr.mxu0 0.0
    %891 = vmatpush1.msra.mxu0 %v74
    %892 = vmatprep.subr.mxu0 0.0
    %893 = vmatpush1.msra.mxu0 %v75
    %894 = vmatprep.subr.mxu0 0.0
    %895 = vmatpush1.msra.mxu0 %v76
    %896 = vmatprep.subr.mxu0 0.0
    %897 = vmatpush1.msra.mxu0 %v77
    %898 = vmatprep.subr.mxu0 0.0
    %899 = vmatpush1.msra.mxu0 %v78
    %900 = vmatprep.subr.mxu0 0.0
    %901 = vmatpush1.msra.mxu0 %v79
    %902 = vmatprep.subr.mxu0 0.0
    %903 = vmatpush1.msra.mxu0 %v80
    %904 = vmatprep.subr.mxu0 0.0
    %905 = vmatpush1.msra.mxu0 %v81
    %906 = vmatprep.subr.mxu0 0.0
    %907 = vmatpush1.msra.mxu0 %v82
    %908 = vmatprep.subr.mxu0 0.0
    %909 = vmatpush1.msra.mxu0 %v83
    %910 = vmatprep.subr.mxu0 0.0
    %911 = vmatpush1.msra.mxu0 0.0
    %912 = vmatprep.subr.mxu0 0.0
    %913 = vmatpush1.msra.mxu0 0.0
    %914 = vmatprep.subr.mxu0 0.0
    %915 = vmatpush1.msra.mxu0 0.0
    %916 = vmatprep.subr.mxu0 0.0
    %917 = vmatpush1.msra.mxu0 0.0
    %918 = vmatprep.subr.mxu0 0.0
    %919 = vmatpush1.msra.mxu0 0.0
    %920 = vmatprep.subr.mxu0 0.0
    %921 = vmatpush1.msra.mxu0 0.0
    %922 = vmatprep.subr.mxu0 0.0
    %923 = vmatpush1.msra.mxu0 0.0
    %924 = vmatprep.subr.mxu0 0.0
    %925 = vmatpush1.msra.mxu0 0.0
    %926 = vmatprep.subr.mxu0 0.0
    %927 = vmatpush1.msra.mxu0 0.0
    %928 = vmatprep.subr.mxu0 0.0
    %929 = vmatpush1.msra.mxu0 0.0
    %930 = vmatprep.subr.mxu0 0.0
    %931 = vmatpush1.msra.mxu0 0.0
    %932 = vmatprep.subr.mxu0 0.0
    %933 = vmatpush1.msra.mxu0 0.0
    %934 = vmatprep.subr.mxu0 0.0
    %935 = vmatpush1.msra.mxu0 0.0
    %936 = vmatprep.subr.mxu0 0.0
    %937 = vmatpush1.msra.mxu0 0.0
    %938 = vmatprep.subr.mxu0 0.0
    %939 = vmatpush1.msra.mxu0 0.0
    %940 = vmatprep.subr.mxu0 0.0
    %941 = vmatpush1.msra.mxu0 0.0
    %942 = vmatprep.mubr.f32.mxu0 0.0
    %943 = vmatmul.mubr.f32.gmra.mrb[0].mxu0 %v876
    %v944 = vpop.f32.mrb[0].mxu0
    %v945 = vadd.f32 %v89, %v944
    %v946 = vpop.f32.mrb[0].mxu0
    %947 = vdwg.mxu0
    %v948 = vmul.f32 %v846, %v103
    %v949 = vtanh.pop %v945
    %v950 = vmul.f32 %v949, %v96
    %v951 = vadd.f32 %v948, %v950
    %v952 = vld [vmem:[#allocation7] sm:$0xff]
    %v953 = vld [vmem:[#allocation7 + $0x8] sm:$0xff]
    %v954 = vld [vmem:[#allocation7 + $0x10] sm:$0xff]
    %v955 = vld [vmem:[#allocation7 + $0x18] sm:$0xff]
    %v956 = vld [vmem:[#allocation7 + $0x20] sm:$0xff]
    %v957 = vld [vmem:[#allocation7 + $0x28] sm:$0xff]
    %v958 = vld [vmem:[#allocation7 + $0x30] sm:$0xff]
    %v959 = vld [vmem:[#allocation7 + $0x38] sm:$0xff]
    %v960 = vld [vmem:[#allocation7 + $0x40] sm:$0xff]
    %v961 = vld [vmem:[#allocation7 + $0x48] sm:$0xff]
    %v962 = vld [vmem:[#allocation7 + $0x50] sm:$0xff]
    %v963 = vld [vmem:[#allocation7 + $0x58] sm:$0xff]
    %v964 = vld [vmem:[#allocation7 + $0x60] sm:$0xff]
    %v965 = vld [vmem:[#allocation7 + $0x68] sm:$0xff]
    %v966 = vld [vmem:[#allocation7 + $0x70] sm:$0xff]
    %v967 = vld [vmem:[#allocation7 + $0x78] sm:$0xff]
    %v968 = vld [vmem:[%s6] sm:$0x1]
    %v970 = vlaneseq
    %v971 = vshrl.u32 %v970, 7
    %v972 = vsub.s32 0, %v971
    %v973 = vrot.slane %v968, %v972
    %975 = vmatprep.subr.mxu0 0.0
    %976 = vmatpush1.msra.mxu0 %v952
    %977 = vmatprep.subr.mxu0 0.0
    %978 = vmatpush1.msra.mxu0 %v953
    %979 = vmatprep.subr.mxu0 0.0
    %980 = vmatpush1.msra.mxu0 %v954
    %981 = vmatprep.subr.mxu0 0.0
    %982 = vmatpush1.msra.mxu0 %v955
    %983 = vmatprep.subr.mxu0 0.0
    %984 = vmatpush1.msra.mxu0 %v956
    %985 = vmatprep.subr.mxu0 0.0
    %986 = vmatpush1.msra.mxu0 %v957
    %987 = vmatprep.subr.mxu0 0.0
    %988 = vmatpush1.msra.mxu0 %v958
    %989 = vmatprep.subr.mxu0 0.0
    %990 = vmatpush1.msra.mxu0 %v959
    %991 = vmatprep.subr.mxu0 0.0
    %992 = vmatpush1.msra.mxu0 %v960
    %993 = vmatprep.subr.mxu0 0.0
    %994 = vmatpush1.msra.mxu0 %v961
    %995 = vmatprep.subr.mxu0 0.0
    %996 = vmatpush1.msra.mxu0 %v962
    %997 = vmatprep.subr.mxu0 0.0
    %998 = vmatpush1.msra.mxu0 %v963
    %999 = vmatprep.subr.mxu0 0.0
    %1000 = vmatpush1.msra.mxu0 %v964
    %1001 = vmatprep.subr.mxu0 0.0
    %1002 = vmatpush1.msra.mxu0 %v965
    %1003 = vmatprep.subr.mxu0 0.0
    %1004 = vmatpush1.msra.mxu0 %v966
    %1005 = vmatprep.subr.mxu0 0.0
    %1006 = vmatpush1.msra.mxu0 %v967
    %1007 = vmatprep.subr.mxu0 0.0
    %1008 = vmatpush1.msra.mxu0 0.0
    %1009 = vmatprep.subr.mxu0 0.0
    %1010 = vmatpush1.msra.mxu0 0.0
    %1011 = vmatprep.subr.mxu0 0.0
    %1012 = vmatpush1.msra.mxu0 0.0
    %1013 = vmatprep.subr.mxu0 0.0
    %1014 = vmatpush1.msra.mxu0 0.0
    %1015 = vmatprep.subr.mxu0 0.0
    %1016 = vmatpush1.msra.mxu0 0.0
    %1017 = vmatprep.subr.mxu0 0.0
    %1018 = vmatpush1.msra.mxu0 0.0
    %1019 = vmatprep.subr.mxu0 0.0
    %1020 = vmatpush1.msra.mxu0 0.0
    %1021 = vmatprep.subr.mxu0 0.0
    %1022 = vmatpush1.msra.mxu0 0.0
    %1023 = vmatprep.subr.mxu0 0.0
    %1024 = vmatpush1.msra.mxu0 0.0
    %1025 = vmatprep.subr.mxu0 0.0
    %1026 = vmatpush1.msra.mxu0 0.0
    %1027 = vmatprep.subr.mxu0 0.0
    %1028 = vmatpush1.msra.mxu0 0.0
    %1029 = vmatprep.subr.mxu0 0.0
    %1030 = vmatpush1.msra.mxu0 0.0
    %1031 = vmatprep.subr.mxu0 0.0
    %1032 = vmatpush1.msra.mxu0 0.0
    %1033 = vmatprep.subr.mxu0 0.0
    %1034 = vmatpush1.msra.mxu0 0.0
    %1035 = vmatprep.subr.mxu0 0.0
    %1036 = vmatpush1.msra.mxu0 0.0
    %1037 = vmatprep.subr.mxu0 0.0
    %1038 = vmatpush1.msra.mxu0 0.0
    %1039 = vmatprep.mubr.f32.mxu0 0.0
    %1040 = vmatmul.mubr.f32.gmra.mrb[0].mxu0 %v951
    %v1041 = vpop.f32.mrb[0].mxu0
    %v1042 = vadd.f32 %v973, %v1041
    %v1043 = vpop.f32.mrb[0].mxu0
    %1044 = vdwg.mxu0
    %1045 = vst [vmem:[#allocation8] sm:$0xff] %v1042
    // Predicated region
    $region42: #{tpu_custom_call.1} parent=1 // pred_check
      _
    $region43: #{tpu_custom_call.1} parent=1 // pred_check_branch
      %1047 = sbr.rel (0) target = $region45
    $region44: #{tpu_custom_call.1} parent=1 // pred_region
      %s1049 = ssub.s32 128, 128
      %1050 = vsyncadd [#allocation4], %s1049
      %s1052 = sshll.u32 [#allocation8], 4
      %s1053 = int_to_ptr.vmem [resolvable:$true] %s1052
      %1055 = dma.vmem_to_hbm [thread:$0]  %s1053, 128, %s7, [#allocation4]
    $region45: #{tpu_custom_call.1} parent=1 // pred_fallthru
      _
    // Predicated region
    $region46: #{tpu_custom_call.1} parent=1 // pred_check
      _
    $region47: #{tpu_custom_call.1} parent=1 // pred_check_branch
      %1057 = sbr.rel (0) target = $region49
    $region48: #{tpu_custom_call.1} parent=1 // pred_region
      %1058 = dma.done [#allocation4], 128
    $region49: #{tpu_custom_call.1} parent=1 // pred_fallthru
      _
    %1059 = vsyncpa [#allocation3], 1
    %1060 = vsyncpa [#allocation6], 1
    %1061 = vsyncpa [#allocation4], 1

</llo_original>
